<compile_context>
chip_gen: v7x
topology: tpu7x:2x2x1
jax: 0.10.0
libtpu: 0.0.40
codegen_flags: <defaults>
</compile_context>

<pallas_src>
import jax
import jax.numpy as jnp
from jax.experimental import pallas as pl
from jax.experimental.pallas import tpu as pltpu

_LANE = 128
_SUBLANE = 8


def _leaky_relu(x, slope=0.2):
    return jnp.where(x > 0, x, slope * x)


def _round_up(n, m):
    return ((n + m - 1) // m) * m


def discriminator_kernel(x_ref, w1_ref, b1_ref, w2_ref, b2_ref, w3_ref, b3_ref,
                         out_ref):
    # Fused MLP on one (batch_tile, in_pad) activation tile. Weights are bf16
    # (cast once in the wrapper); accumulation stays in f32 on the MXU.
    x = x_ref[...].astype(jnp.bfloat16)

    h = jnp.dot(x, w1_ref[...], preferred_element_type=jnp.float32) + b1_ref[...]
    h = _leaky_relu(h)

    h = jnp.dot(h.astype(jnp.bfloat16), w2_ref[...],
                preferred_element_type=jnp.float32) + b2_ref[...]
    h = _leaky_relu(h)

    v = jnp.dot(h.astype(jnp.bfloat16), w3_ref[...],
                preferred_element_type=jnp.float32) + b3_ref[...]
    out_ref[...] = v.astype(out_ref.dtype)


def discriminator_forward(img, params, *, batch_tile=256):
    """img: (B, C, H, W) float32 (NCHW). Returns validity (B, 1) float32."""
    w1, b1, w2, b2, w3, b3 = params
    B = img.shape[0]
    in_dim, h1 = w1.shape
    h2 = w2.shape[1]
    out_dim = w3.shape[1]

    # Glue: PyTorch `img.view(B, -1)` == row-major flatten of NCHW.
    x = img.reshape(B, -1).astype(jnp.float32)
    assert x.shape[1] == in_dim, (x.shape, in_dim)

    # Pad K of the first (dominant) matmul up to a lane multiple.
    in_pad = _round_up(in_dim, _LANE)
    if in_pad != in_dim:
        x = jnp.pad(x, ((0, 0), (0, in_pad - in_dim)))
        w1 = jnp.pad(w1, ((0, in_pad - in_dim), (0, 0)))

    # Lane-dense output: pad the 1-wide last layer with zero columns to 128.
    out_pad = _round_up(out_dim, _LANE)
    if out_pad != out_dim:
        w3 = jnp.pad(w3, ((0, 0), (0, out_pad - out_dim)))
        b3 = jnp.pad(b3, ((0, 0), (0, out_pad - out_dim)))

    # bf16 weights once in the wrapper; biases stay f32 (added to f32 accum).
    w1b = w1.astype(jnp.bfloat16)
    w2b = w2.astype(jnp.bfloat16)
    w3b = w3.astype(jnp.bfloat16)
    b1 = b1.astype(jnp.float32)
    b2 = b2.astype(jnp.float32)
    b3 = b3.astype(jnp.float32)

    # Batch tiling: clamp to the (sublane-rounded) batch, then pad B so it
    # divides evenly. Any batch size works now.
    bt = min(batch_tile, _round_up(B, _SUBLANE))
    bt = _round_up(bt, _SUBLANE)
    B_pad = _round_up(B, bt)
    if B_pad != B:
        x = jnp.pad(x, ((0, B_pad - B), (0, 0)))

    # NOTE: for large B on v7x keep >= 2 grid steps so both TensorCores get
    # work (axis is "parallel"); with tiny test batches a single step is fine.
    grid = (B_pad // bt,)

    kernel = pl.pallas_call(
        discriminator_kernel,
        out_shape=jax.ShapeDtypeStruct((B_pad, out_pad), jnp.float32),
        grid_spec=pl.GridSpec(
            grid=grid,
            in_specs=[
                # x: tiled over batch
                pl.BlockSpec((bt, in_pad), lambda i: (i, 0)),
                # weights / biases: same full block every grid step (resident)
                pl.BlockSpec((in_pad, h1), lambda i: (0, 0)),
                pl.BlockSpec((1, h1), lambda i: (0, 0)),
                pl.BlockSpec((h1, h2), lambda i: (0, 0)),
                pl.BlockSpec((1, h2), lambda i: (0, 0)),
                pl.BlockSpec((h2, out_pad), lambda i: (0, 0)),
                pl.BlockSpec((1, out_pad), lambda i: (0, 0)),
            ],
            out_specs=pl.BlockSpec((bt, out_pad), lambda i: (i, 0)),
        ),
        compiler_params=pltpu.CompilerParams(
            dimension_semantics=("parallel",),
            vmem_limit_bytes=48 * 1024 * 1024,
        ),
    )
    out = kernel(x, w1b, b1, w2b, b2, w3b, b3)
    # Drop batch padding and the zero output lanes.
    return out[:B, :out_dim]


def init_params(key, in_dim, h1=512, h2=256, out_dim=1):
    """Deterministic init mimicking PyTorch nn.Linear default U[-1/sqrt(fan_in), +]."""
    ks = jax.random.split(key, 6)

    def lin(kw, kb, fan_in, fan_out):
        bound = 1.0 / jnp.sqrt(fan_in)
        w = jax.random.uniform(kw, (fan_in, fan_out), jnp.float32, -bound, bound)
        b = jax.random.uniform(kb, (1, fan_out), jnp.float32, -bound, bound)
        return w, b

    w1, b1 = lin(ks[0], ks[1], in_dim, h1)
    w2, b2 = lin(ks[2], ks[3], h1, h2)
    w3, b3 = lin(ks[4], ks[5], h2, out_dim)
    return (w1, b1, w2, b2, w3, b3)


def reference_forward(img, params, *, bf16=False):
    w1, b1, w2, b2, w3, b3 = params
    x = img.reshape(img.shape[0], -1)

    if bf16:
        def dot(a, w):
            return jnp.dot(a.astype(jnp.bfloat16), w.astype(jnp.bfloat16),
                           preferred_element_type=jnp.float32)
    else:
        def dot(a, w):
            return jnp.dot(a, w, preferred_element_type=jnp.float32)

    h = _leaky_relu(dot(x, w1) + b1)
    h = _leaky_relu(dot(h, w2) + b2)
    return dot(h, w3) + b3


if __name__ == "__main__":
    # Small shapes: img_shape = (1, 14, 14) -> 196 input features (exercises
    # K-padding to 256), batch = 10 (exercises batch padding).
    B, C, H, W = 10, 1, 14, 14
    in_dim = C * H * W

    key = jax.random.PRNGKey(0)
    k_img, k_params = jax.random.split(key)

    img = jax.random.normal(k_img, (B, C, H, W), dtype=jnp.float32)
    params = init_params(k_params, in_dim)

    out = discriminator_forward(img, params)
    out = jax.block_until_ready(out)
    assert out.shape == (B, 1), out.shape

    # Check against a bf16-matmul reference (same precision recipe, tight tol)
    ref_bf16 = reference_forward(img, params, bf16=True)
    assert jnp.allclose(out, ref_bf16, atol=2e-3, rtol=2e-3), "mismatch vs bf16 reference"

    # And against the fp32 reference with a loose tolerance (bf16 weights).
    ref_f32 = reference_forward(img, params, bf16=False)
    assert jnp.allclose(out, ref_f32, atol=5e-2, rtol=5e-2), "mismatch vs fp32 reference"

    print("KERNEL_OK")
</pallas_src>

<mosaic_0001>
module attributes {stable_mosaic.version = 11 : i64} {
  func.func @discriminator_kernel(%arg0: i32, %arg1: memref<16x256xf32, #tpu.memory_space<vmem>>, %arg2: memref<256x512xbf16, #tpu.memory_space<vmem>>, %arg3: memref<1x512xf32, #tpu.memory_space<vmem>>, %arg4: memref<512x256xbf16, #tpu.memory_space<vmem>>, %arg5: memref<1x256xf32, #tpu.memory_space<vmem>>, %arg6: memref<256x128xbf16, #tpu.memory_space<vmem>>, %arg7: memref<1x128xf32, #tpu.memory_space<vmem>>, %arg8: memref<16x128xf32, #tpu.memory_space<vmem>>) attributes {dimension_semantics = [#tpu.dimension_semantics<parallel>], iteration_bounds = array<i64: 1>, scalar_prefetch = 0 : i64, scratch_operands = 0 : i64, tpu.core_type = #tpu.core_type<tc>, window_params = [{transform_indices = @transform_0, window_bounds = array<i64: 16, 256>}, {pipeline_mode = #tpu.pipeline_mode<synchronous>, transform_indices = @transform_1, window_bounds = array<i64: 256, 512>}, {pipeline_mode = #tpu.pipeline_mode<synchronous>, transform_indices = @transform_2, window_bounds = array<i64: 1, 512>}, {pipeline_mode = #tpu.pipeline_mode<synchronous>, transform_indices = @transform_3, window_bounds = array<i64: 512, 256>}, {pipeline_mode = #tpu.pipeline_mode<synchronous>, transform_indices = @transform_4, window_bounds = array<i64: 1, 256>}, {pipeline_mode = #tpu.pipeline_mode<synchronous>, transform_indices = @transform_5, window_bounds = array<i64: 256, 128>}, {pipeline_mode = #tpu.pipeline_mode<synchronous>, transform_indices = @transform_6, window_bounds = array<i64: 1, 128>}, {transform_indices = @transform_7, window_bounds = array<i64: 16, 128>}]} {
    %c0 = arith.constant 0 : index
    %c0_0 = arith.constant 0 : index
    %0 = vector.load %arg1[%c0, %c0_0] : memref<16x256xf32, #tpu.memory_space<vmem>>, vector<16x256xf32>
    %1 = arith.truncf %0 : vector<16x256xf32> to vector<16x256xbf16>
    %c0_1 = arith.constant 0 : index
    %c0_2 = arith.constant 0 : index
    %2 = vector.load %arg2[%c0_1, %c0_2] : memref<256x512xbf16, #tpu.memory_space<vmem>>, vector<256x512xbf16>
    %cst = arith.constant dense<0.000000e+00> : vector<16x512xf32>
    %3 = tpu.matmul %1, %2, %cst {dimension_numbers = #tpu.dot_dimension_numbers<[1], [0], [0], [1], [0, 0, 1, 1], [], []>} : vector<16x256xbf16>, vector<256x512xbf16>, vector<16x512xf32> -> vector<16x512xf32>
    %c0_3 = arith.constant 0 : index
    %c0_4 = arith.constant 0 : index
    %4 = vector.load %arg3[%c0_3, %c0_4] : memref<1x512xf32, #tpu.memory_space<vmem>>, vector<1x512xf32>
    %5 = vector.broadcast %4 : vector<1x512xf32> to vector<16x512xf32>
    %6 = arith.addf %3, %5 : vector<16x512xf32>
    %cst_5 = arith.constant 0.000000e+00 : f32
    %7 = vector.broadcast %cst_5 : f32 to vector<16x512xf32>
    %8 = arith.cmpf ogt, %6, %7 : vector<16x512xf32>
    %cst_6 = arith.constant 2.000000e-01 : f32
    %9 = vector.broadcast %cst_6 : f32 to vector<16x512xf32>
    %10 = arith.mulf %9, %6 : vector<16x512xf32>
    %11 = arith.select %8, %6, %10 : vector<16x512xi1>, vector<16x512xf32>
    %12 = arith.truncf %11 : vector<16x512xf32> to vector<16x512xbf16>
    %c0_7 = arith.constant 0 : index
    %c0_8 = arith.constant 0 : index
    %13 = vector.load %arg4[%c0_7, %c0_8] : memref<512x256xbf16, #tpu.memory_space<vmem>>, vector<512x256xbf16>
    %cst_9 = arith.constant dense<0.000000e+00> : vector<16x256xf32>
    %14 = tpu.matmul %12, %13, %cst_9 {dimension_numbers = #tpu.dot_dimension_numbers<[1], [0], [0], [1], [0, 0, 1, 1], [], []>} : vector<16x512xbf16>, vector<512x256xbf16>, vector<16x256xf32> -> vector<16x256xf32>
    %c0_10 = arith.constant 0 : index
    %c0_11 = arith.constant 0 : index
    %15 = vector.load %arg5[%c0_10, %c0_11] : memref<1x256xf32, #tpu.memory_space<vmem>>, vector<1x256xf32>
    %16 = vector.broadcast %15 : vector<1x256xf32> to vector<16x256xf32>
    %17 = arith.addf %14, %16 : vector<16x256xf32>
    %cst_12 = arith.constant 0.000000e+00 : f32
    %18 = vector.broadcast %cst_12 : f32 to vector<16x256xf32>
    %19 = arith.cmpf ogt, %17, %18 : vector<16x256xf32>
    %cst_13 = arith.constant 2.000000e-01 : f32
    %20 = vector.broadcast %cst_13 : f32 to vector<16x256xf32>
    %21 = arith.mulf %20, %17 : vector<16x256xf32>
    %22 = arith.select %19, %17, %21 : vector<16x256xi1>, vector<16x256xf32>
    %23 = arith.truncf %22 : vector<16x256xf32> to vector<16x256xbf16>
    %c0_14 = arith.constant 0 : index
    %c0_15 = arith.constant 0 : index
    %24 = vector.load %arg6[%c0_14, %c0_15] : memref<256x128xbf16, #tpu.memory_space<vmem>>, vector<256x128xbf16>
    %cst_16 = arith.constant dense<0.000000e+00> : vector<16x128xf32>
    %25 = tpu.matmul %23, %24, %cst_16 {dimension_numbers = #tpu.dot_dimension_numbers<[1], [0], [0], [1], [0, 0, 1, 1], [], []>} : vector<16x256xbf16>, vector<256x128xbf16>, vector<16x128xf32> -> vector<16x128xf32>
    %c0_17 = arith.constant 0 : index
    %c0_18 = arith.constant 0 : index
    %26 = vector.load %arg7[%c0_17, %c0_18] : memref<1x128xf32, #tpu.memory_space<vmem>>, vector<1x128xf32>
    %27 = vector.broadcast %26 : vector<1x128xf32> to vector<16x128xf32>
    %28 = arith.addf %25, %27 : vector<16x128xf32>
    %c0_19 = arith.constant 0 : index
    %c0_20 = arith.constant 0 : index
    %29 = vector.load %arg8[%c0_19, %c0_20] : memref<16x128xf32, #tpu.memory_space<vmem>>, vector<16x128xf32>
    tpu.vector_store %arg8[%c0_19, %c0_20], %28 {strides = array<i32>} : memref<16x128xf32, #tpu.memory_space<vmem>>, vector<16x128xf32>,
    return
  }
  func.func @transform_0(%arg0: i32) -> (i32, i32) {
    %c0_i32 = arith.constant 0 : i32
    %c0_i32_0 = arith.constant 0 : i32
    return %arg0, %c0_i32 : i32, i32
  }
  func.func @transform_1(%arg0: i32) -> (i32, i32) {
    %c0_i32 = arith.constant 0 : i32
    %c0_i32_0 = arith.constant 0 : i32
    %c0_i32_1 = arith.constant 0 : i32
    return %c0_i32, %c0_i32_0 : i32, i32
  }
  func.func @transform_2(%arg0: i32) -> (i32, i32) {
    %c0_i32 = arith.constant 0 : i32
    %c0_i32_0 = arith.constant 0 : i32
    %c0_i32_1 = arith.constant 0 : i32
    return %c0_i32, %c0_i32_0 : i32, i32
  }
  func.func @transform_3(%arg0: i32) -> (i32, i32) {
    %c0_i32 = arith.constant 0 : i32
    %c0_i32_0 = arith.constant 0 : i32
    %c0_i32_1 = arith.constant 0 : i32
    return %c0_i32, %c0_i32_0 : i32, i32
  }
  func.func @transform_4(%arg0: i32) -> (i32, i32) {
    %c0_i32 = arith.constant 0 : i32
    %c0_i32_0 = arith.constant 0 : i32
    %c0_i32_1 = arith.constant 0 : i32
    return %c0_i32, %c0_i32_0 : i32, i32
  }
  func.func @transform_5(%arg0: i32) -> (i32, i32) {
    %c0_i32 = arith.constant 0 : i32
    %c0_i32_0 = arith.constant 0 : i32
    %c0_i32_1 = arith.constant 0 : i32
    return %c0_i32, %c0_i32_0 : i32, i32
  }
  func.func @transform_6(%arg0: i32) -> (i32, i32) {
    %c0_i32 = arith.constant 0 : i32
    %c0_i32_0 = arith.constant 0 : i32
    %c0_i32_1 = arith.constant 0 : i32
    return %c0_i32, %c0_i32_0 : i32, i32
  }
  func.func @transform_7(%arg0: i32) -> (i32, i32) {
    %c0_i32 = arith.constant 0 : i32
    %c0_i32_0 = arith.constant 0 : i32
    return %arg0, %c0_i32 : i32, i32
  }
}

</mosaic_0001>

<llo_original>
// kernel: tpu_custom_call.1
$region0: #{tpu_custom_call.1}
  #allocation0 [shape = 'u32[]', space=smem, size = 0x4, offset = 0x4, fixed_abs, tag = 'smem constant byte address 0x4 - core index']
  #allocation1 [shape = 'u32[144,128]{1,0:T(1,128)}', space=vmem, size = 0x12000, scoped, tag = 'internal scratch']
  %s0 = inlined_call_operand.hbm [shape: f32[16,256], index: 0, kind: input, shape index: {}]
  %s1 = inlined_call_operand.hbm [shape: bf16[256,512], index: 1, kind: input, shape index: {}]
  %s2 = inlined_call_operand.vmem [shape: f32[1,512], index: 2, kind: input, shape index: {}]
  %s3 = inlined_call_operand.hbm [shape: bf16[512,256], index: 3, kind: input, shape index: {}]
  %s4 = inlined_call_operand.vmem [shape: f32[1,256], index: 4, kind: input, shape index: {}]
  %s5 = inlined_call_operand.hbm [shape: bf16[256,128], index: 5, kind: input, shape index: {}]
  %s6 = inlined_call_operand.vmem [shape: f32[1,128], index: 6, kind: input, shape index: {}]
  %s7 = inlined_call_operand.hbm [shape: f32[16,128], index: 7, kind: output, shape index: {}]
  %s8 = sld [smem:[#allocation0]]
  $region54: #{tpu_custom_call.1} parent=0
    _
  %s10 = ssub.s32 1, %s8
  %s11 = scalar_select 0, %s10, %s8
  $region1: #{tpu_custom_call.1} parent=0
    #allocation2 [shape = 'u8[16384]{0}', space=vmem, size = 0x4000, scoped, tag = 'input window, operand 0, single buffered']
    #allocation3 [shape = 's32[1]{0}', space=sflag, size = 0x4, scoped, tag = 'scoped memory for tpu_custom_call.1']
    #allocation4 [shape = 's32[1]{0}', space=sflag, size = 0x4, scoped, tag = 'scoped memory for tpu_custom_call.1']
    #allocation5 [shape = 'u8[262144]{0}', space=vmem, size = 0x40000, scoped, tag = 'input window, operand 1, single buffered']
    #allocation6 [shape = 's32[1]{0}', space=sflag, size = 0x4, scoped, tag = 'scoped memory for tpu_custom_call.1']
    #allocation7 [shape = 'u8[262144]{0}', space=vmem, size = 0x40000, scoped, tag = 'input window, operand 3, single buffered']
    #allocation8 [shape = 'u8[65536]{0}', space=vmem, size = 0x10000, scoped, tag = 'input window, operand 5, single buffered']
    #allocation9 [shape = 's32[1]{0}', space=sflag, size = 0x4, scoped, tag = 'scoped memory for tpu_custom_call.1']
    #allocation10 [shape = 'u8[8192]{0}', space=vmem, size = 0x2000, scoped, tag = 'output window, operand 0, single buffered']
    %12 = vsyncpa [#allocation3], 0
    %13 = vsyncpa [#allocation6], 0
    %14 = vsyncpa [#allocation9], 0
    %15 = vsyncpa [#allocation4], 0
    // Predicated region
    $region2: #{tpu_custom_call.1} parent=1 // pred_check
      _
    $region3: #{tpu_custom_call.1} parent=1 // pred_check_branch
      %17 = sbr.rel (0) target = $region5
    $region4: #{tpu_custom_call.1} parent=1 // pred_region
      %s19 = ssub.s32 512, 512
      %20 = vsyncadd [#allocation3], %s19
      %s21 = sshll.u32 [#allocation2], 4
      %s22 = int_to_ptr.vmem [resolvable:$true] %s21
      %27 = dma.hbm_to_vmem [thread:$0]  %s0, 512, %s22, [#allocation3], 256, 256, 16
    $region5: #{tpu_custom_call.1} parent=1 // pred_fallthru
      _
    // Predicated region
    $region6: #{tpu_custom_call.1} parent=1 // pred_check
      _
    $region7: #{tpu_custom_call.1} parent=1 // pred_check_branch
      %29 = sbr.rel (0) target = $region9
    $region8: #{tpu_custom_call.1} parent=1 // pred_region
      %s31 = ssub.s32 8192, 8192
      %32 = vsyncadd [#allocation6], %s31
      %s33 = sshll.u32 [#allocation5], 4
      %s34 = int_to_ptr.vmem [resolvable:$true] %s33
      %39 = dma.hbm_to_vmem [thread:$0]  %s1, 8192, %s34, [#allocation6], 256, 256, 16
    $region9: #{tpu_custom_call.1} parent=1 // pred_fallthru
      _
    // Predicated region
    $region10: #{tpu_custom_call.1} parent=1 // pred_check
      _
    $region11: #{tpu_custom_call.1} parent=1 // pred_check_branch
      %41 = sbr.rel (0) target = $region13
    $region12: #{tpu_custom_call.1} parent=1 // pred_region
      _
    $region13: #{tpu_custom_call.1} parent=1 // pred_fallthru
      _
    // Predicated region
    $region14: #{tpu_custom_call.1} parent=1 // pred_check
      _
    $region15: #{tpu_custom_call.1} parent=1 // pred_check_branch
      %43 = sbr.rel (0) target = $region17
    $region16: #{tpu_custom_call.1} parent=1 // pred_region
      %s45 = ssub.s32 8192, 8192
      %46 = vsyncadd [#allocation6], %s45
      %s47 = sshll.u32 [#allocation7], 4
      %s48 = int_to_ptr.vmem [resolvable:$true] %s47
      %53 = dma.hbm_to_vmem [thread:$0]  %s3, 8192, %s48, [#allocation6], 128, 128, 8
    $region17: #{tpu_custom_call.1} parent=1 // pred_fallthru
      _
    // Predicated region
    $region18: #{tpu_custom_call.1} parent=1 // pred_check
      _
    $region19: #{tpu_custom_call.1} parent=1 // pred_check_branch
      %55 = sbr.rel (0) target = $region21
    $region20: #{tpu_custom_call.1} parent=1 // pred_region
      _
    $region21: #{tpu_custom_call.1} parent=1 // pred_fallthru
      _
    // Predicated region
    $region22: #{tpu_custom_call.1} parent=1 // pred_check
      _
    $region23: #{tpu_custom_call.1} parent=1 // pred_check_branch
      %57 = sbr.rel (0) target = $region25
    $region24: #{tpu_custom_call.1} parent=1 // pred_region
      %s59 = ssub.s32 2048, 2048
      %60 = vsyncadd [#allocation9], %s59
      %s61 = sshll.u32 [#allocation8], 4
      %s62 = int_to_ptr.vmem [resolvable:$true] %s61
      %67 = dma.hbm_to_vmem [thread:$0]  %s5, 2048, %s62, [#allocation9], 64, 64, 4
    $region25: #{tpu_custom_call.1} parent=1 // pred_fallthru
      _
    // Predicated region
    $region26: #{tpu_custom_call.1} parent=1 // pred_check
      _
    $region27: #{tpu_custom_call.1} parent=1 // pred_check_branch
      %69 = sbr.rel (0) target = $region29
    $region28: #{tpu_custom_call.1} parent=1 // pred_region
      _
    $region29: #{tpu_custom_call.1} parent=1 // pred_fallthru
      _
    // Predicated region
    $region30: #{tpu_custom_call.1} parent=1 // pred_check
      _
    $region31: #{tpu_custom_call.1} parent=1 // pred_check_branch
      %71 = sbr.rel (0) target = $region33
    $region32: #{tpu_custom_call.1} parent=1 // pred_region
      %72 = dma.done [#allocation3], 512
    $region33: #{tpu_custom_call.1} parent=1 // pred_fallthru
      _
    // Predicated region
    $region34: #{tpu_custom_call.1} parent=1 // pred_check
      _
    $region35: #{tpu_custom_call.1} parent=1 // pred_check_branch
      %74 = sbr.rel (0) target = $region37
    $region36: #{tpu_custom_call.1} parent=1 // pred_region
      %75 = dma.done [#allocation6], 8192
    $region37: #{tpu_custom_call.1} parent=1 // pred_fallthru
      _
    // Predicated region
    $region38: #{tpu_custom_call.1} parent=1 // pred_check
      _
    $region39: #{tpu_custom_call.1} parent=1 // pred_check_branch
      %77 = sbr.rel (0) target = $region41
    $region40: #{tpu_custom_call.1} parent=1 // pred_region
      %78 = dma.done [#allocation6], 8192
    $region41: #{tpu_custom_call.1} parent=1 // pred_fallthru
      _
    // Predicated region
    $region42: #{tpu_custom_call.1} parent=1 // pred_check
      _
    $region43: #{tpu_custom_call.1} parent=1 // pred_check_branch
      %80 = sbr.rel (0) target = $region45
    $region44: #{tpu_custom_call.1} parent=1 // pred_region
      %81 = dma.done [#allocation9], 2048
    $region45: #{tpu_custom_call.1} parent=1 // pred_fallthru
      _
    %v83 = vld [vmem:[#allocation2] sm:$0xff]
    %v84 = vld [vmem:[#allocation2 + $0x8] sm:$0xff]
    %v85 = vld [vmem:[#allocation2 + $0x10] sm:$0xff]
    %v86 = vld [vmem:[#allocation2 + $0x18] sm:$0xff]
    %v87 = vpack.c.bf16 %v85, %v83
    %v88 = vpack.c.bf16 %v86, %v84
    %v89 = vld [vmem:[#allocation5] sm:$0xff]
    %v90 = vld [vmem:[#allocation5 + $0x8] sm:$0xff]
    %v91 = vld [vmem:[#allocation5 + $0x10] sm:$0xff]
    %v92 = vld [vmem:[#allocation5 + $0x18] sm:$0xff]
    %v93 = vld [vmem:[#allocation5 + $0x20] sm:$0xff]
    %v94 = vld [vmem:[#allocation5 + $0x28] sm:$0xff]
    %v95 = vld [vmem:[#allocation5 + $0x30] sm:$0xff]
    %v96 = vld [vmem:[#allocation5 + $0x38] sm:$0xff]
    %v97 = vld [vmem:[#allocation5 + $0x40] sm:$0xff]
    %v98 = vld [vmem:[#allocation5 + $0x48] sm:$0xff]
    %v99 = vld [vmem:[#allocation5 + $0x50] sm:$0xff]
    %v100 = vld [vmem:[#allocation5 + $0x58] sm:$0xff]
    %v101 = vld [vmem:[#allocation5 + $0x60] sm:$0xff]
    %v102 = vld [vmem:[#allocation5 + $0x68] sm:$0xff]
    %v103 = vld [vmem:[#allocation5 + $0x70] sm:$0xff]
    %v104 = vld [vmem:[#allocation5 + $0x78] sm:$0xff]
    %v105 = vld [vmem:[#allocation5 + $0x80] sm:$0xff]
    %v106 = vld [vmem:[#allocation5 + $0x88] sm:$0xff]
    %v107 = vld [vmem:[#allocation5 + $0x90] sm:$0xff]
    %v108 = vld [vmem:[#allocation5 + $0x98] sm:$0xff]
    %v109 = vld [vmem:[#allocation5 + $0xa0] sm:$0xff]
    %v110 = vld [vmem:[#allocation5 + $0xa8] sm:$0xff]
    %v111 = vld [vmem:[#allocation5 + $0xb0] sm:$0xff]
    %v112 = vld [vmem:[#allocation5 + $0xb8] sm:$0xff]
    %v113 = vld [vmem:[#allocation5 + $0xc0] sm:$0xff]
    %v114 = vld [vmem:[#allocation5 + $0xc8] sm:$0xff]
    %v115 = vld [vmem:[#allocation5 + $0xd0] sm:$0xff]
    %v116 = vld [vmem:[#allocation5 + $0xd8] sm:$0xff]
    %v117 = vld [vmem:[#allocation5 + $0xe0] sm:$0xff]
    %v118 = vld [vmem:[#allocation5 + $0xe8] sm:$0xff]
    %v119 = vld [vmem:[#allocation5 + $0xf0] sm:$0xff]
    %v120 = vld [vmem:[#allocation5 + $0xf8] sm:$0xff]
    %v121 = vld [vmem:[#allocation5 + $0x100] sm:$0xff]
    %v122 = vld [vmem:[#allocation5 + $0x108] sm:$0xff]
    %v123 = vld [vmem:[#allocation5 + $0x110] sm:$0xff]
    %v124 = vld [vmem:[#allocation5 + $0x118] sm:$0xff]
    %v125 = vld [vmem:[#allocation5 + $0x120] sm:$0xff]
    %v126 = vld [vmem:[#allocation5 + $0x128] sm:$0xff]
    %v127 = vld [vmem:[#allocation5 + $0x130] sm:$0xff]
    %v128 = vld [vmem:[#allocation5 + $0x138] sm:$0xff]
    %v129 = vld [vmem:[#allocation5 + $0x140] sm:$0xff]
    %v130 = vld [vmem:[#allocation5 + $0x148] sm:$0xff]
    %v131 = vld [vmem:[#allocation5 + $0x150] sm:$0xff]
    %v132 = vld [vmem:[#allocation5 + $0x158] sm:$0xff]
    %v133 = vld [vmem:[#allocation5 + $0x160] sm:$0xff]
    %v134 = vld [vmem:[#allocation5 + $0x168] sm:$0xff]
    %v135 = vld [vmem:[#allocation5 + $0x170] sm:$0xff]
    %v136 = vld [vmem:[#allocation5 + $0x178] sm:$0xff]
    %v137 = vld [vmem:[#allocation5 + $0x180] sm:$0xff]
    %v138 = vld [vmem:[#allocation5 + $0x188] sm:$0xff]
    %v139 = vld [vmem:[#allocation5 + $0x190] sm:$0xff]
    %v140 = vld [vmem:[#allocation5 + $0x198] sm:$0xff]
    %v141 = vld [vmem:[#allocation5 + $0x1a0] sm:$0xff]
    %v142 = vld [vmem:[#allocation5 + $0x1a8] sm:$0xff]
    %v143 = vld [vmem:[#allocation5 + $0x1b0] sm:$0xff]
    %v144 = vld [vmem:[#allocation5 + $0x1b8] sm:$0xff]
    %v145 = vld [vmem:[#allocation5 + $0x1c0] sm:$0xff]
    %v146 = vld [vmem:[#allocation5 + $0x1c8] sm:$0xff]
    %v147 = vld [vmem:[#allocation5 + $0x1d0] sm:$0xff]
    %v148 = vld [vmem:[#allocation5 + $0x1d8] sm:$0xff]
    %v149 = vld [vmem:[#allocation5 + $0x1e0] sm:$0xff]
    %v150 = vld [vmem:[#allocation5 + $0x1e8] sm:$0xff]
    %v151 = vld [vmem:[#allocation5 + $0x1f0] sm:$0xff]
    %v152 = vld [vmem:[#allocation5 + $0x1f8] sm:$0xff]
    %v153 = vld [vmem:[%s2] sm:$0xf]
    %v155 = vlaneseq
    %v156 = vshrl.u32 %v155, 7
    %v157 = vsub.s32 0, %v156
    %v158 = vrot.slane %v153, %v157
    %v159 = vlaneseq
    %v160 = vshrl.u32 %v159, 7
    %v161 = vsub.s32 1, %v160
    %v162 = vrot.slane %v153, %v161
    %v163 = vlaneseq
    %v164 = vshrl.u32 %v163, 7
    %v165 = vsub.s32 2, %v164
    %v166 = vrot.slane %v153, %v165
    %v167 = vlaneseq
    %v168 = vshrl.u32 %v167, 7
    %v169 = vsub.s32 3, %v168
    %v170 = vrot.slane %v153, %v169
    %v239 = vunpack.c.l.b16 %v89
    %v240 = vunpack.c.h.b16 %v89
    %v241 = vunpack.c.l.b16 %v90
    %v242 = vunpack.c.h.b16 %v90
    %v243 = vunpack.c.l.b16 %v91
    %v244 = vunpack.c.h.b16 %v91
    %v245 = vunpack.c.l.b16 %v92
    %v246 = vunpack.c.h.b16 %v92
    %v247 = vunpack.c.l.b16 %v93
    %v248 = vunpack.c.h.b16 %v93
    %v249 = vunpack.c.l.b16 %v94
    %v250 = vunpack.c.h.b16 %v94
    %v251 = vunpack.c.l.b16 %v95
    %v252 = vunpack.c.h.b16 %v95
    %v253 = vunpack.c.l.b16 %v96
    %v254 = vunpack.c.h.b16 %v96
    %v255 = vunpack.c.l.b16 %v97
    %v256 = vunpack.c.h.b16 %v97
    %v257 = vunpack.c.l.b16 %v98
    %v258 = vunpack.c.h.b16 %v98
    %v259 = vunpack.c.l.b16 %v99
    %v260 = vunpack.c.h.b16 %v99
    %v261 = vunpack.c.l.b16 %v100
    %v262 = vunpack.c.h.b16 %v100
    %v263 = vunpack.c.l.b16 %v101
    %v264 = vunpack.c.h.b16 %v101
    %v265 = vunpack.c.l.b16 %v102
    %v266 = vunpack.c.h.b16 %v102
    %v267 = vunpack.c.l.b16 %v103
    %v268 = vunpack.c.h.b16 %v103
    %v269 = vunpack.c.l.b16 %v104
    %v270 = vunpack.c.h.b16 %v104
    %v271 = vunpack.c.l.b16 %v105
    %v272 = vunpack.c.h.b16 %v105
    %v273 = vunpack.c.l.b16 %v106
    %v274 = vunpack.c.h.b16 %v106
    %v275 = vunpack.c.l.b16 %v107
    %v276 = vunpack.c.h.b16 %v107
    %v277 = vunpack.c.l.b16 %v108
    %v278 = vunpack.c.h.b16 %v108
    %v279 = vunpack.c.l.b16 %v109
    %v280 = vunpack.c.h.b16 %v109
    %v281 = vunpack.c.l.b16 %v110
    %v282 = vunpack.c.h.b16 %v110
    %v283 = vunpack.c.l.b16 %v111
    %v284 = vunpack.c.h.b16 %v111
    %v285 = vunpack.c.l.b16 %v112
    %v286 = vunpack.c.h.b16 %v112
    %v287 = vunpack.c.l.b16 %v113
    %v288 = vunpack.c.h.b16 %v113
    %v289 = vunpack.c.l.b16 %v114
    %v290 = vunpack.c.h.b16 %v114
    %v291 = vunpack.c.l.b16 %v115
    %v292 = vunpack.c.h.b16 %v115
    %v293 = vunpack.c.l.b16 %v116
    %v294 = vunpack.c.h.b16 %v116
    %v295 = vunpack.c.l.b16 %v117
    %v296 = vunpack.c.h.b16 %v117
    %v297 = vunpack.c.l.b16 %v118
    %v298 = vunpack.c.h.b16 %v118
    %v299 = vunpack.c.l.b16 %v119
    %v300 = vunpack.c.h.b16 %v119
    %v301 = vunpack.c.l.b16 %v120
    %v302 = vunpack.c.h.b16 %v120
    %v303 = vunpack.c.l.b16 %v121
    %v304 = vunpack.c.h.b16 %v121
    %v305 = vunpack.c.l.b16 %v122
    %v306 = vunpack.c.h.b16 %v122
    %v307 = vunpack.c.l.b16 %v123
    %v308 = vunpack.c.h.b16 %v123
    %v309 = vunpack.c.l.b16 %v124
    %v310 = vunpack.c.h.b16 %v124
    %v311 = vunpack.c.l.b16 %v125
    %v312 = vunpack.c.h.b16 %v125
    %v313 = vunpack.c.l.b16 %v126
    %v314 = vunpack.c.h.b16 %v126
    %v315 = vunpack.c.l.b16 %v127
    %v316 = vunpack.c.h.b16 %v127
    %v317 = vunpack.c.l.b16 %v128
    %v318 = vunpack.c.h.b16 %v128
    %v319 = vunpack.c.l.b16 %v129
    %v320 = vunpack.c.h.b16 %v129
    %v321 = vunpack.c.l.b16 %v130
    %v322 = vunpack.c.h.b16 %v130
    %v323 = vunpack.c.l.b16 %v131
    %v324 = vunpack.c.h.b16 %v131
    %v325 = vunpack.c.l.b16 %v132
    %v326 = vunpack.c.h.b16 %v132
    %v327 = vunpack.c.l.b16 %v133
    %v328 = vunpack.c.h.b16 %v133
    %v329 = vunpack.c.l.b16 %v134
    %v330 = vunpack.c.h.b16 %v134
    %v331 = vunpack.c.l.b16 %v135
    %v332 = vunpack.c.h.b16 %v135
    %v333 = vunpack.c.l.b16 %v136
    %v334 = vunpack.c.h.b16 %v136
    %v335 = vunpack.c.l.b16 %v137
    %v336 = vunpack.c.h.b16 %v137
    %v337 = vunpack.c.l.b16 %v138
    %v338 = vunpack.c.h.b16 %v138
    %v339 = vunpack.c.l.b16 %v139
    %v340 = vunpack.c.h.b16 %v139
    %v341 = vunpack.c.l.b16 %v140
    %v342 = vunpack.c.h.b16 %v140
    %v343 = vunpack.c.l.b16 %v141
    %v344 = vunpack.c.h.b16 %v141
    %v345 = vunpack.c.l.b16 %v142
    %v346 = vunpack.c.h.b16 %v142
    %v347 = vunpack.c.l.b16 %v143
    %v348 = vunpack.c.h.b16 %v143
    %v349 = vunpack.c.l.b16 %v144
    %v350 = vunpack.c.h.b16 %v144
    %v351 = vunpack.c.l.b16 %v145
    %v352 = vunpack.c.h.b16 %v145
    %v353 = vunpack.c.l.b16 %v146
    %v354 = vunpack.c.h.b16 %v146
    %v355 = vunpack.c.l.b16 %v147
    %v356 = vunpack.c.h.b16 %v147
    %v357 = vunpack.c.l.b16 %v148
    %v358 = vunpack.c.h.b16 %v148
    %v359 = vunpack.c.l.b16 %v149
    %v360 = vunpack.c.h.b16 %v149
    %v361 = vunpack.c.l.b16 %v150
    %v362 = vunpack.c.h.b16 %v150
    %v363 = vunpack.c.l.b16 %v151
    %v364 = vunpack.c.h.b16 %v151
    %v365 = vunpack.c.l.b16 %v152
    %v366 = vunpack.c.h.b16 %v152
    %v367 = vpack.c.b16 %v243, %v239
    %v368 = vpack.c.b16 %v244, %v240
    %v369 = vpack.c.b16 %v245, %v241
    %v370 = vpack.c.b16 %v246, %v242
    %v371 = vpack.c.b16 %v251, %v247
    %v372 = vpack.c.b16 %v252, %v248
    %v373 = vpack.c.b16 %v253, %v249
    %v374 = vpack.c.b16 %v254, %v250
    %v375 = vpack.c.b16 %v259, %v255
    %v376 = vpack.c.b16 %v260, %v256
    %v377 = vpack.c.b16 %v261, %v257
    %v378 = vpack.c.b16 %v262, %v258
    %v379 = vpack.c.b16 %v267, %v263
    %v380 = vpack.c.b16 %v268, %v264
    %v381 = vpack.c.b16 %v269, %v265
    %v382 = vpack.c.b16 %v270, %v266
    %v383 = vpack.c.b16 %v275, %v271
    %v384 = vpack.c.b16 %v276, %v272
    %v385 = vpack.c.b16 %v277, %v273
    %v386 = vpack.c.b16 %v278, %v274
    %v387 = vpack.c.b16 %v283, %v279
    %v388 = vpack.c.b16 %v284, %v280
    %v389 = vpack.c.b16 %v285, %v281
    %v390 = vpack.c.b16 %v286, %v282
    %v391 = vpack.c.b16 %v291, %v287
    %v392 = vpack.c.b16 %v292, %v288
    %v393 = vpack.c.b16 %v293, %v289
    %v394 = vpack.c.b16 %v294, %v290
    %v395 = vpack.c.b16 %v299, %v295
    %v396 = vpack.c.b16 %v300, %v296
    %v397 = vpack.c.b16 %v301, %v297
    %v398 = vpack.c.b16 %v302, %v298
    %v399 = vpack.c.b16 %v307, %v303
    %v400 = vpack.c.b16 %v308, %v304
    %v401 = vpack.c.b16 %v309, %v305
    %v402 = vpack.c.b16 %v310, %v306
    %v403 = vpack.c.b16 %v315, %v311
    %v404 = vpack.c.b16 %v316, %v312
    %v405 = vpack.c.b16 %v317, %v313
    %v406 = vpack.c.b16 %v318, %v314
    %v407 = vpack.c.b16 %v323, %v319
    %v408 = vpack.c.b16 %v324, %v320
    %v409 = vpack.c.b16 %v325, %v321
    %v410 = vpack.c.b16 %v326, %v322
    %v411 = vpack.c.b16 %v331, %v327
    %v412 = vpack.c.b16 %v332, %v328
    %v413 = vpack.c.b16 %v333, %v329
    %v414 = vpack.c.b16 %v334, %v330
    %v415 = vpack.c.b16 %v339, %v335
    %v416 = vpack.c.b16 %v340, %v336
    %v417 = vpack.c.b16 %v341, %v337
    %v418 = vpack.c.b16 %v342, %v338
    %v419 = vpack.c.b16 %v347, %v343
    %v420 = vpack.c.b16 %v348, %v344
    %v421 = vpack.c.b16 %v349, %v345
    %v422 = vpack.c.b16 %v350, %v346
    %v423 = vpack.c.b16 %v355, %v351
    %v424 = vpack.c.b16 %v356, %v352
    %v425 = vpack.c.b16 %v357, %v353
    %v426 = vpack.c.b16 %v358, %v354
    %v427 = vpack.c.b16 %v363, %v359
    %v428 = vpack.c.b16 %v364, %v360
    %v429 = vpack.c.b16 %v365, %v361
    %v430 = vpack.c.b16 %v366, %v362
    %495 = vmatprep.subr.bf16.mxu0 %v368
    %496 = vmatpush1.bf16.msra.mxu0 %v367
    %497 = vmatprep.subr.bf16.mxu0 %v372
    %498 = vmatpush1.bf16.msra.mxu0 %v371
    %499 = vmatprep.subr.bf16.mxu0 %v376
    %500 = vmatpush1.bf16.msra.mxu0 %v375
    %501 = vmatprep.subr.bf16.mxu0 %v380
    %502 = vmatpush1.bf16.msra.mxu0 %v379
    %503 = vmatprep.subr.bf16.mxu0 %v384
    %504 = vmatpush1.bf16.msra.mxu0 %v383
    %505 = vmatprep.subr.bf16.mxu0 %v388
    %506 = vmatpush1.bf16.msra.mxu0 %v387
    %507 = vmatprep.subr.bf16.mxu0 %v392
    %508 = vmatpush1.bf16.msra.mxu0 %v391
    %509 = vmatprep.subr.bf16.mxu0 %v396
    %510 = vmatpush1.bf16.msra.mxu0 %v395
    %511 = vmatprep.subr.bf16.mxu0 %v400
    %512 = vmatpush1.bf16.msra.mxu0 %v399
    %513 = vmatprep.subr.bf16.mxu0 %v404
    %514 = vmatpush1.bf16.msra.mxu0 %v403
    %515 = vmatprep.subr.bf16.mxu0 %v408
    %516 = vmatpush1.bf16.msra.mxu0 %v407
    %517 = vmatprep.subr.bf16.mxu0 %v412
    %518 = vmatpush1.bf16.msra.mxu0 %v411
    %519 = vmatprep.subr.bf16.mxu0 %v416
    %520 = vmatpush1.bf16.msra.mxu0 %v415
    %521 = vmatprep.subr.bf16.mxu0 %v420
    %522 = vmatpush1.bf16.msra.mxu0 %v419
    %523 = vmatprep.subr.bf16.mxu0 %v424
    %524 = vmatpush1.bf16.msra.mxu0 %v423
    %525 = vmatprep.subr.bf16.mxu0 %v428
    %526 = vmatpush1.bf16.msra.mxu0 %v427
    %527 = vmatprep.mubr.bf16.mxu0 %v88
    %528 = vmatmul.mubr.bf16.gmra.mrb[0].mxu0 %v87
    %v529 = vpop.f32.mrb[0].mxu0
    %v530 = vadd.f32 %v158, %v529
    %v531 = vpop.f32.mrb[0].mxu0
    %v532 = vadd.f32 %v162, %v531
    %v533 = vpop.f32.mrb[0].mxu0
    %v534 = vadd.f32 %v158, %v533
    %v535 = vpop.f32.mrb[0].mxu0
    %v536 = vadd.f32 %v162, %v535
    %537 = vdwg.mxu0
    %538 = vmatprep.subr.bf16.mxu0 %v370
    %539 = vmatpush1.bf16.msra.mxu0 %v369
    %540 = vmatprep.subr.bf16.mxu0 %v374
    %541 = vmatpush1.bf16.msra.mxu0 %v373
    %542 = vmatprep.subr.bf16.mxu0 %v378
    %543 = vmatpush1.bf16.msra.mxu0 %v377
    %544 = vmatprep.subr.bf16.mxu0 %v382
    %545 = vmatpush1.bf16.msra.mxu0 %v381
    %546 = vmatprep.subr.bf16.mxu0 %v386
    %547 = vmatpush1.bf16.msra.mxu0 %v385
    %548 = vmatprep.subr.bf16.mxu0 %v390
    %549 = vmatpush1.bf16.msra.mxu0 %v389
    %550 = vmatprep.subr.bf16.mxu0 %v394
    %551 = vmatpush1.bf16.msra.mxu0 %v393
    %552 = vmatprep.subr.bf16.mxu0 %v398
    %553 = vmatpush1.bf16.msra.mxu0 %v397
    %554 = vmatprep.subr.bf16.mxu0 %v402
    %555 = vmatpush1.bf16.msra.mxu0 %v401
    %556 = vmatprep.subr.bf16.mxu0 %v406
    %557 = vmatpush1.bf16.msra.mxu0 %v405
    %558 = vmatprep.subr.bf16.mxu0 %v410
    %559 = vmatpush1.bf16.msra.mxu0 %v409
    %560 = vmatprep.subr.bf16.mxu0 %v414
    %561 = vmatpush1.bf16.msra.mxu0 %v413
    %562 = vmatprep.subr.bf16.mxu0 %v418
    %563 = vmatpush1.bf16.msra.mxu0 %v417
    %564 = vmatprep.subr.bf16.mxu0 %v422
    %565 = vmatpush1.bf16.msra.mxu0 %v421
    %566 = vmatprep.subr.bf16.mxu0 %v426
    %567 = vmatpush1.bf16.msra.mxu0 %v425
    %568 = vmatprep.subr.bf16.mxu0 %v430
    %569 = vmatpush1.bf16.msra.mxu0 %v429
    %570 = vmatprep.mubr.bf16.mxu0 %v88
    %571 = vmatmul.mubr.bf16.gmra.mrb[0].mxu0 %v87
    %v572 = vpop.f32.mrb[0].mxu0
    %v573 = vadd.f32 %v166, %v572
    %v574 = vpop.f32.mrb[0].mxu0
    %v575 = vadd.f32 %v170, %v574
    %v576 = vpop.f32.mrb[0].mxu0
    %v577 = vadd.f32 %v166, %v576
    %v578 = vpop.f32.mrb[0].mxu0
    %v579 = vadd.f32 %v170, %v578
    %580 = vdwg.mxu0
    %vm581 = vcmp.gt.f32.partialorder %v530, 0.0
    %vm582 = vcmp.gt.f32.partialorder %v532, 0.0
    %vm583 = vcmp.gt.f32.partialorder %v573, 0.0
    %vm584 = vcmp.gt.f32.partialorder %v575, 0.0
    %vm585 = vcmp.gt.f32.partialorder %v534, 0.0
    %vm586 = vcmp.gt.f32.partialorder %v536, 0.0
    %vm587 = vcmp.gt.f32.partialorder %v577, 0.0
    %vm588 = vcmp.gt.f32.partialorder %v579, 0.0
    %v589 = vmul.f32 %v530, 0.2
    %v590 = vmul.f32 %v532, 0.2
    %v591 = vmul.f32 %v573, 0.2
    %v592 = vmul.f32 %v575, 0.2
    %v593 = vmul.f32 %v534, 0.2
    %v594 = vmul.f32 %v536, 0.2
    %v595 = vmul.f32 %v577, 0.2
    %v596 = vmul.f32 %v579, 0.2
    %v597 = vsel %vm581, %v530, %v589
    %v598 = vsel %vm582, %v532, %v590
    %v599 = vsel %vm583, %v573, %v591
    %v600 = vsel %vm584, %v575, %v592
    %v601 = vsel %vm585, %v534, %v593
    %v602 = vsel %vm586, %v536, %v594
    %v603 = vsel %vm587, %v577, %v595
    %v604 = vsel %vm588, %v579, %v596
    %v605 = vpack.c.bf16 %v601, %v597
    %v606 = vpack.c.bf16 %v602, %v598
    %v607 = vpack.c.bf16 %v603, %v599
    %v608 = vpack.c.bf16 %v604, %v600
    %v609 = vld [vmem:[#allocation7] sm:$0xff]
    %v610 = vld [vmem:[#allocation7 + $0x8] sm:$0xff]
    %v611 = vld [vmem:[#allocation7 + $0x10] sm:$0xff]
    %v612 = vld [vmem:[#allocation7 + $0x18] sm:$0xff]
    %v613 = vld [vmem:[#allocation7 + $0x20] sm:$0xff]
    %v614 = vld [vmem:[#allocation7 + $0x28] sm:$0xff]
    %v615 = vld [vmem:[#allocation7 + $0x30] sm:$0xff]
    %v616 = vld [vmem:[#allocation7 + $0x38] sm:$0xff]
    %v617 = vld [vmem:[#allocation7 + $0x40] sm:$0xff]
    %v618 = vld [vmem:[#allocation7 + $0x48] sm:$0xff]
    %v619 = vld [vmem:[#allocation7 + $0x50] sm:$0xff]
    %v620 = vld [vmem:[#allocation7 + $0x58] sm:$0xff]
    %v621 = vld [vmem:[#allocation7 + $0x60] sm:$0xff]
    %v622 = vld [vmem:[#allocation7 + $0x68] sm:$0xff]
    %v623 = vld [vmem:[#allocation7 + $0x70] sm:$0xff]
    %v624 = vld [vmem:[#allocation7 + $0x78] sm:$0xff]
    %v625 = vld [vmem:[#allocation7 + $0x80] sm:$0xff]
    %v626 = vld [vmem:[#allocation7 + $0x88] sm:$0xff]
    %v627 = vld [vmem:[#allocation7 + $0x90] sm:$0xff]
    %v628 = vld [vmem:[#allocation7 + $0x98] sm:$0xff]
    %v629 = vld [vmem:[#allocation7 + $0xa0] sm:$0xff]
    %v630 = vld [vmem:[#allocation7 + $0xa8] sm:$0xff]
    %v631 = vld [vmem:[#allocation7 + $0xb0] sm:$0xff]
    %v632 = vld [vmem:[#allocation7 + $0xb8] sm:$0xff]
    %v633 = vld [vmem:[#allocation7 + $0xc0] sm:$0xff]
    %v634 = vld [vmem:[#allocation7 + $0xc8] sm:$0xff]
    %v635 = vld [vmem:[#allocation7 + $0xd0] sm:$0xff]
    %v636 = vld [vmem:[#allocation7 + $0xd8] sm:$0xff]
    %v637 = vld [vmem:[#allocation7 + $0xe0] sm:$0xff]
    %v638 = vld [vmem:[#allocation7 + $0xe8] sm:$0xff]
    %v639 = vld [vmem:[#allocation7 + $0xf0] sm:$0xff]
    %v640 = vld [vmem:[#allocation7 + $0xf8] sm:$0xff]
    %v641 = vld [vmem:[#allocation7 + $0x100] sm:$0xff]
    %v642 = vld [vmem:[#allocation7 + $0x108] sm:$0xff]
    %v643 = vld [vmem:[#allocation7 + $0x110] sm:$0xff]
    %v644 = vld [vmem:[#allocation7 + $0x118] sm:$0xff]
    %v645 = vld [vmem:[#allocation7 + $0x120] sm:$0xff]
    %v646 = vld [vmem:[#allocation7 + $0x128] sm:$0xff]
    %v647 = vld [vmem:[#allocation7 + $0x130] sm:$0xff]
    %v648 = vld [vmem:[#allocation7 + $0x138] sm:$0xff]
    %v649 = vld [vmem:[#allocation7 + $0x140] sm:$0xff]
    %v650 = vld [vmem:[#allocation7 + $0x148] sm:$0xff]
    %v651 = vld [vmem:[#allocation7 + $0x150] sm:$0xff]
    %v652 = vld [vmem:[#allocation7 + $0x158] sm:$0xff]
    %v653 = vld [vmem:[#allocation7 + $0x160] sm:$0xff]
    %v654 = vld [vmem:[#allocation7 + $0x168] sm:$0xff]
    %v655 = vld [vmem:[#allocation7 + $0x170] sm:$0xff]
    %v656 = vld [vmem:[#allocation7 + $0x178] sm:$0xff]
    %v657 = vld [vmem:[#allocation7 + $0x180] sm:$0xff]
    %v658 = vld [vmem:[#allocation7 + $0x188] sm:$0xff]
    %v659 = vld [vmem:[#allocation7 + $0x190] sm:$0xff]
    %v660 = vld [vmem:[#allocation7 + $0x198] sm:$0xff]
    %v661 = vld [vmem:[#allocation7 + $0x1a0] sm:$0xff]
    %v662 = vld [vmem:[#allocation7 + $0x1a8] sm:$0xff]
    %v663 = vld [vmem:[#allocation7 + $0x1b0] sm:$0xff]
    %v664 = vld [vmem:[#allocation7 + $0x1b8] sm:$0xff]
    %v665 = vld [vmem:[#allocation7 + $0x1c0] sm:$0xff]
    %v666 = vld [vmem:[#allocation7 + $0x1c8] sm:$0xff]
    %v667 = vld [vmem:[#allocation7 + $0x1d0] sm:$0xff]
    %v668 = vld [vmem:[#allocation7 + $0x1d8] sm:$0xff]
    %v669 = vld [vmem:[#allocation7 + $0x1e0] sm:$0xff]
    %v670 = vld [vmem:[#allocation7 + $0x1e8] sm:$0xff]
    %v671 = vld [vmem:[#allocation7 + $0x1f0] sm:$0xff]
    %v672 = vld [vmem:[#allocation7 + $0x1f8] sm:$0xff]
    %v673 = vld [vmem:[%s4] sm:$0x3]
    %v675 = vlaneseq
    %v676 = vshrl.u32 %v675, 7
    %v677 = vsub.s32 0, %v676
    %v678 = vrot.slane %v673, %v677
    %v679 = vlaneseq
    %v680 = vshrl.u32 %v679, 7
    %v681 = vsub.s32 1, %v680
    %v682 = vrot.slane %v673, %v681
    %v749 = vunpack.c.l.b16 %v609
    %v750 = vunpack.c.h.b16 %v609
    %v751 = vunpack.c.l.b16 %v610
    %v752 = vunpack.c.h.b16 %v610
    %v753 = vunpack.c.l.b16 %v611
    %v754 = vunpack.c.h.b16 %v611
    %v755 = vunpack.c.l.b16 %v612
    %v756 = vunpack.c.h.b16 %v612
    %v757 = vunpack.c.l.b16 %v613
    %v758 = vunpack.c.h.b16 %v613
    %v759 = vunpack.c.l.b16 %v614
    %v760 = vunpack.c.h.b16 %v614
    %v761 = vunpack.c.l.b16 %v615
    %v762 = vunpack.c.h.b16 %v615
    %v763 = vunpack.c.l.b16 %v616
    %v764 = vunpack.c.h.b16 %v616
    %v765 = vunpack.c.l.b16 %v617
    %v766 = vunpack.c.h.b16 %v617
    %v767 = vunpack.c.l.b16 %v618
    %v768 = vunpack.c.h.b16 %v618
    %v769 = vunpack.c.l.b16 %v619
    %v770 = vunpack.c.h.b16 %v619
    %v771 = vunpack.c.l.b16 %v620
    %v772 = vunpack.c.h.b16 %v620
    %v773 = vunpack.c.l.b16 %v621
    %v774 = vunpack.c.h.b16 %v621
    %v775 = vunpack.c.l.b16 %v622
    %v776 = vunpack.c.h.b16 %v622
    %v777 = vunpack.c.l.b16 %v623
    %v778 = vunpack.c.h.b16 %v623
    %v779 = vunpack.c.l.b16 %v624
    %v780 = vunpack.c.h.b16 %v624
    %v781 = vunpack.c.l.b16 %v625
    %v782 = vunpack.c.h.b16 %v625
    %v783 = vunpack.c.l.b16 %v626
    %v784 = vunpack.c.h.b16 %v626
    %v785 = vunpack.c.l.b16 %v627
    %v786 = vunpack.c.h.b16 %v627
    %v787 = vunpack.c.l.b16 %v628
    %v788 = vunpack.c.h.b16 %v628
    %v789 = vunpack.c.l.b16 %v629
    %v790 = vunpack.c.h.b16 %v629
    %v791 = vunpack.c.l.b16 %v630
    %v792 = vunpack.c.h.b16 %v630
    %v793 = vunpack.c.l.b16 %v631
    %v794 = vunpack.c.h.b16 %v631
    %v795 = vunpack.c.l.b16 %v632
    %v796 = vunpack.c.h.b16 %v632
    %v797 = vunpack.c.l.b16 %v633
    %v798 = vunpack.c.h.b16 %v633
    %v799 = vunpack.c.l.b16 %v634
    %v800 = vunpack.c.h.b16 %v634
    %v801 = vunpack.c.l.b16 %v635
    %v802 = vunpack.c.h.b16 %v635
    %v803 = vunpack.c.l.b16 %v636
    %v804 = vunpack.c.h.b16 %v636
    %v805 = vunpack.c.l.b16 %v637
    %v806 = vunpack.c.h.b16 %v637
    %v807 = vunpack.c.l.b16 %v638
    %v808 = vunpack.c.h.b16 %v638
    %v809 = vunpack.c.l.b16 %v639
    %v810 = vunpack.c.h.b16 %v639
    %v811 = vunpack.c.l.b16 %v640
    %v812 = vunpack.c.h.b16 %v640
    %v813 = vunpack.c.l.b16 %v641
    %v814 = vunpack.c.h.b16 %v641
    %v815 = vunpack.c.l.b16 %v642
    %v816 = vunpack.c.h.b16 %v642
    %v817 = vunpack.c.l.b16 %v643
    %v818 = vunpack.c.h.b16 %v643
    %v819 = vunpack.c.l.b16 %v644
    %v820 = vunpack.c.h.b16 %v644
    %v821 = vunpack.c.l.b16 %v645
    %v822 = vunpack.c.h.b16 %v645
    %v823 = vunpack.c.l.b16 %v646
    %v824 = vunpack.c.h.b16 %v646
    %v825 = vunpack.c.l.b16 %v647
    %v826 = vunpack.c.h.b16 %v647
    %v827 = vunpack.c.l.b16 %v648
    %v828 = vunpack.c.h.b16 %v648
    %v829 = vunpack.c.l.b16 %v649
    %v830 = vunpack.c.h.b16 %v649
    %v831 = vunpack.c.l.b16 %v650
    %v832 = vunpack.c.h.b16 %v650
    %v833 = vunpack.c.l.b16 %v651
    %v834 = vunpack.c.h.b16 %v651
    %v835 = vunpack.c.l.b16 %v652
    %v836 = vunpack.c.h.b16 %v652
    %v837 = vunpack.c.l.b16 %v653
    %v838 = vunpack.c.h.b16 %v653
    %v839 = vunpack.c.l.b16 %v654
    %v840 = vunpack.c.h.b16 %v654
    %v841 = vunpack.c.l.b16 %v655
    %v842 = vunpack.c.h.b16 %v655
    %v843 = vunpack.c.l.b16 %v656
    %v844 = vunpack.c.h.b16 %v656
    %v845 = vunpack.c.l.b16 %v657
    %v846 = vunpack.c.h.b16 %v657
    %v847 = vunpack.c.l.b16 %v658
    %v848 = vunpack.c.h.b16 %v658
    %v849 = vunpack.c.l.b16 %v659
    %v850 = vunpack.c.h.b16 %v659
    %v851 = vunpack.c.l.b16 %v660
    %v852 = vunpack.c.h.b16 %v660
    %v853 = vunpack.c.l.b16 %v661
    %v854 = vunpack.c.h.b16 %v661
    %v855 = vunpack.c.l.b16 %v662
    %v856 = vunpack.c.h.b16 %v662
    %v857 = vunpack.c.l.b16 %v663
    %v858 = vunpack.c.h.b16 %v663
    %v859 = vunpack.c.l.b16 %v664
    %v860 = vunpack.c.h.b16 %v664
    %v861 = vunpack.c.l.b16 %v665
    %v862 = vunpack.c.h.b16 %v665
    %v863 = vunpack.c.l.b16 %v666
    %v864 = vunpack.c.h.b16 %v666
    %v865 = vunpack.c.l.b16 %v667
    %v866 = vunpack.c.h.b16 %v667
    %v867 = vunpack.c.l.b16 %v668
    %v868 = vunpack.c.h.b16 %v668
    %v869 = vunpack.c.l.b16 %v669
    %v870 = vunpack.c.h.b16 %v669
    %v871 = vunpack.c.l.b16 %v670
    %v872 = vunpack.c.h.b16 %v670
    %v873 = vunpack.c.l.b16 %v671
    %v874 = vunpack.c.h.b16 %v671
    %v875 = vunpack.c.l.b16 %v672
    %v876 = vunpack.c.h.b16 %v672
    %v877 = vpack.c.b16 %v751, %v749
    %v878 = vpack.c.b16 %v752, %v750
    %v879 = vpack.c.b16 %v755, %v753
    %v880 = vpack.c.b16 %v756, %v754
    %v881 = vpack.c.b16 %v759, %v757
    %v882 = vpack.c.b16 %v760, %v758
    %v883 = vpack.c.b16 %v763, %v761
    %v884 = vpack.c.b16 %v764, %v762
    %v885 = vpack.c.b16 %v767, %v765
    %v886 = vpack.c.b16 %v768, %v766
    %v887 = vpack.c.b16 %v771, %v769
    %v888 = vpack.c.b16 %v772, %v770
    %v889 = vpack.c.b16 %v775, %v773
    %v890 = vpack.c.b16 %v776, %v774
    %v891 = vpack.c.b16 %v779, %v777
    %v892 = vpack.c.b16 %v780, %v778
    %v893 = vpack.c.b16 %v783, %v781
    %v894 = vpack.c.b16 %v784, %v782
    %v895 = vpack.c.b16 %v787, %v785
    %v896 = vpack.c.b16 %v788, %v786
    %v897 = vpack.c.b16 %v791, %v789
    %v898 = vpack.c.b16 %v792, %v790
    %v899 = vpack.c.b16 %v795, %v793
    %v900 = vpack.c.b16 %v796, %v794
    %v901 = vpack.c.b16 %v799, %v797
    %v902 = vpack.c.b16 %v800, %v798
    %v903 = vpack.c.b16 %v803, %v801
    %v904 = vpack.c.b16 %v804, %v802
    %v905 = vpack.c.b16 %v807, %v805
    %v906 = vpack.c.b16 %v808, %v806
    %v907 = vpack.c.b16 %v811, %v809
    %v908 = vpack.c.b16 %v812, %v810
    %v909 = vpack.c.b16 %v815, %v813
    %v910 = vpack.c.b16 %v816, %v814
    %v911 = vpack.c.b16 %v819, %v817
    %v912 = vpack.c.b16 %v820, %v818
    %v913 = vpack.c.b16 %v823, %v821
    %v914 = vpack.c.b16 %v824, %v822
    %v915 = vpack.c.b16 %v827, %v825
    %v916 = vpack.c.b16 %v828, %v826
    %v917 = vpack.c.b16 %v831, %v829
    %v918 = vpack.c.b16 %v832, %v830
    %v919 = vpack.c.b16 %v835, %v833
    %v920 = vpack.c.b16 %v836, %v834
    %v921 = vpack.c.b16 %v839, %v837
    %v922 = vpack.c.b16 %v840, %v838
    %v923 = vpack.c.b16 %v843, %v841
    %v924 = vpack.c.b16 %v844, %v842
    %v925 = vpack.c.b16 %v847, %v845
    %v926 = vpack.c.b16 %v848, %v846
    %v927 = vpack.c.b16 %v851, %v849
    %v928 = vpack.c.b16 %v852, %v850
    %v929 = vpack.c.b16 %v855, %v853
    %v930 = vpack.c.b16 %v856, %v854
    %v931 = vpack.c.b16 %v859, %v857
    %v932 = vpack.c.b16 %v860, %v858
    %v933 = vpack.c.b16 %v863, %v861
    %v934 = vpack.c.b16 %v864, %v862
    %v935 = vpack.c.b16 %v867, %v865
    %v936 = vpack.c.b16 %v868, %v866
    %v937 = vpack.c.b16 %v871, %v869
    %v938 = vpack.c.b16 %v872, %v870
    %v939 = vpack.c.b16 %v875, %v873
    %v940 = vpack.c.b16 %v876, %v874
    %1005 = vmatprep.subr.bf16.mxu0 %v878
    %1006 = vmatpush1.bf16.msra.mxu0 %v877
    %1007 = vmatprep.subr.bf16.mxu0 %v880
    %1008 = vmatpush1.bf16.msra.mxu0 %v879
    %1009 = vmatprep.subr.bf16.mxu0 %v882
    %1010 = vmatpush1.bf16.msra.mxu0 %v881
    %1011 = vmatprep.subr.bf16.mxu0 %v884
    %1012 = vmatpush1.bf16.msra.mxu0 %v883
    %1013 = vmatprep.subr.bf16.mxu0 %v886
    %1014 = vmatpush1.bf16.msra.mxu0 %v885
    %1015 = vmatprep.subr.bf16.mxu0 %v888
    %1016 = vmatpush1.bf16.msra.mxu0 %v887
    %1017 = vmatprep.subr.bf16.mxu0 %v890
    %1018 = vmatpush1.bf16.msra.mxu0 %v889
    %1019 = vmatprep.subr.bf16.mxu0 %v892
    %1020 = vmatpush1.bf16.msra.mxu0 %v891
    %1021 = vmatprep.subr.bf16.mxu0 %v894
    %1022 = vmatpush1.bf16.msra.mxu0 %v893
    %1023 = vmatprep.subr.bf16.mxu0 %v896
    %1024 = vmatpush1.bf16.msra.mxu0 %v895
    %1025 = vmatprep.subr.bf16.mxu0 %v898
    %1026 = vmatpush1.bf16.msra.mxu0 %v897
    %1027 = vmatprep.subr.bf16.mxu0 %v900
    %1028 = vmatpush1.bf16.msra.mxu0 %v899
    %1029 = vmatprep.subr.bf16.mxu0 %v902
    %1030 = vmatpush1.bf16.msra.mxu0 %v901
    %1031 = vmatprep.subr.bf16.mxu0 %v904
    %1032 = vmatpush1.bf16.msra.mxu0 %v903
    %1033 = vmatprep.subr.bf16.mxu0 %v906
    %1034 = vmatpush1.bf16.msra.mxu0 %v905
    %1035 = vmatprep.subr.bf16.mxu0 %v908
    %1036 = vmatpush1.bf16.msra.mxu0 %v907
    %1037 = vmatprep.mubr.bf16.mxu0 %v606
    %1038 = vmatmul.mubr.bf16.gmra.mrb[0].mxu0 %v605
    %v1039 = vpop.f32.mrb[0].mxu0
    %v1040 = vadd.f32 %v678, %v1039
    %v1041 = vpop.f32.mrb[0].mxu0
    %v1042 = vadd.f32 %v682, %v1041
    %v1043 = vpop.f32.mrb[0].mxu0
    %v1044 = vadd.f32 %v678, %v1043
    %v1045 = vpop.f32.mrb[0].mxu0
    %v1046 = vadd.f32 %v682, %v1045
    %1047 = vdwg.mxu0
    %1048 = vmatprep.subr.bf16.mxu0 %v910
    %1049 = vmatpush1.bf16.msra.mxu0 %v909
    %1050 = vmatprep.subr.bf16.mxu0 %v912
    %1051 = vmatpush1.bf16.msra.mxu0 %v911
    %1052 = vmatprep.subr.bf16.mxu0 %v914
    %1053 = vmatpush1.bf16.msra.mxu0 %v913
    %1054 = vmatprep.subr.bf16.mxu0 %v916
    %1055 = vmatpush1.bf16.msra.mxu0 %v915
    %1056 = vmatprep.subr.bf16.mxu0 %v918
    %1057 = vmatpush1.bf16.msra.mxu0 %v917
    %1058 = vmatprep.subr.bf16.mxu0 %v920
    %1059 = vmatpush1.bf16.msra.mxu0 %v919
    %1060 = vmatprep.subr.bf16.mxu0 %v922
    %1061 = vmatpush1.bf16.msra.mxu0 %v921
    %1062 = vmatprep.subr.bf16.mxu0 %v924
    %1063 = vmatpush1.bf16.msra.mxu0 %v923
    %1064 = vmatprep.subr.bf16.mxu0 %v926
    %1065 = vmatpush1.bf16.msra.mxu0 %v925
    %1066 = vmatprep.subr.bf16.mxu0 %v928
    %1067 = vmatpush1.bf16.msra.mxu0 %v927
    %1068 = vmatprep.subr.bf16.mxu0 %v930
    %1069 = vmatpush1.bf16.msra.mxu0 %v929
    %1070 = vmatprep.subr.bf16.mxu0 %v932
    %1071 = vmatpush1.bf16.msra.mxu0 %v931
    %1072 = vmatprep.subr.bf16.mxu0 %v934
    %1073 = vmatpush1.bf16.msra.mxu0 %v933
    %1074 = vmatprep.subr.bf16.mxu0 %v936
    %1075 = vmatpush1.bf16.msra.mxu0 %v935
    %1076 = vmatprep.subr.bf16.mxu0 %v938
    %1077 = vmatpush1.bf16.msra.mxu0 %v937
    %1078 = vmatprep.subr.bf16.mxu0 %v940
    %1079 = vmatpush1.bf16.msra.mxu0 %v939
    %1080 = vmatprep.mubr.bf16.mxu0 %v608
    %1081 = vmatmul.mubr.bf16.gmra.mrb[0].mxu0 %v607
    %v1082 = vpop.f32.mrb[0].mxu0
    %v1083 = vadd.f32 %v1040, %v1082
    %v1084 = vpop.f32.mrb[0].mxu0
    %v1085 = vadd.f32 %v1042, %v1084
    %v1086 = vpop.f32.mrb[0].mxu0
    %v1087 = vadd.f32 %v1044, %v1086
    %v1088 = vpop.f32.mrb[0].mxu0
    %v1089 = vadd.f32 %v1046, %v1088
    %1090 = vdwg.mxu0
    %vm1091 = vcmp.gt.f32.partialorder %v1083, 0.0
    %vm1092 = vcmp.gt.f32.partialorder %v1085, 0.0
    %vm1093 = vcmp.gt.f32.partialorder %v1087, 0.0
    %vm1094 = vcmp.gt.f32.partialorder %v1089, 0.0
    %v1095 = vmul.f32 %v1083, 0.2
    %v1096 = vmul.f32 %v1085, 0.2
    %v1097 = vmul.f32 %v1087, 0.2
    %v1098 = vmul.f32 %v1089, 0.2
    %v1099 = vsel %vm1091, %v1083, %v1095
    %v1100 = vsel %vm1092, %v1085, %v1096
    %v1101 = vsel %vm1093, %v1087, %v1097
    %v1102 = vsel %vm1094, %v1089, %v1098
    %v1103 = vpack.c.bf16 %v1101, %v1099
    %v1104 = vpack.c.bf16 %v1102, %v1100
    %v1105 = vld [vmem:[#allocation8] sm:$0xf]
    %v1106 = vld [vmem:[#allocation8 + $0x4] sm:$0xf]
    %v1107 = vld [vmem:[#allocation8 + $0x8] sm:$0xf]
    %v1108 = vld [vmem:[#allocation8 + $0xc] sm:$0xf]
    %v1109 = vld [vmem:[#allocation8 + $0x10] sm:$0xf]
    %v1110 = vld [vmem:[#allocation8 + $0x14] sm:$0xf]
    %v1111 = vld [vmem:[#allocation8 + $0x18] sm:$0xf]
    %v1112 = vld [vmem:[#allocation8 + $0x1c] sm:$0xf]
    %v1113 = vld [vmem:[#allocation8 + $0x20] sm:$0xf]
    %v1114 = vld [vmem:[#allocation8 + $0x24] sm:$0xf]
    %v1115 = vld [vmem:[#allocation8 + $0x28] sm:$0xf]
    %v1116 = vld [vmem:[#allocation8 + $0x2c] sm:$0xf]
    %v1117 = vld [vmem:[#allocation8 + $0x30] sm:$0xf]
    %v1118 = vld [vmem:[#allocation8 + $0x34] sm:$0xf]
    %v1119 = vld [vmem:[#allocation8 + $0x38] sm:$0xf]
    %v1120 = vld [vmem:[#allocation8 + $0x3c] sm:$0xf]
    %v1121 = vld [vmem:[#allocation8 + $0x40] sm:$0xf]
    %v1122 = vld [vmem:[#allocation8 + $0x44] sm:$0xf]
    %v1123 = vld [vmem:[#allocation8 + $0x48] sm:$0xf]
    %v1124 = vld [vmem:[#allocation8 + $0x4c] sm:$0xf]
    %v1125 = vld [vmem:[#allocation8 + $0x50] sm:$0xf]
    %v1126 = vld [vmem:[#allocation8 + $0x54] sm:$0xf]
    %v1127 = vld [vmem:[#allocation8 + $0x58] sm:$0xf]
    %v1128 = vld [vmem:[#allocation8 + $0x5c] sm:$0xf]
    %v1129 = vld [vmem:[#allocation8 + $0x60] sm:$0xf]
    %v1130 = vld [vmem:[#allocation8 + $0x64] sm:$0xf]
    %v1131 = vld [vmem:[#allocation8 + $0x68] sm:$0xf]
    %v1132 = vld [vmem:[#allocation8 + $0x6c] sm:$0xf]
    %v1133 = vld [vmem:[#allocation8 + $0x70] sm:$0xf]
    %v1134 = vld [vmem:[#allocation8 + $0x74] sm:$0xf]
    %v1135 = vld [vmem:[#allocation8 + $0x78] sm:$0xf]
    %v1136 = vld [vmem:[#allocation8 + $0x7c] sm:$0xf]
    %v1137 = vld [vmem:[%s6] sm:$0x1]
    %v1139 = vlaneseq
    %v1140 = vshrl.u32 %v1139, 7
    %v1141 = vsub.s32 0, %v1140
    %v1142 = vrot.slane %v1137, %v1141
    %v1176 = vunpack.c.l.b16 %v1105
    %v1177 = vunpack.c.l.b16 %v1106
    %v1178 = vunpack.c.l.b16 %v1107
    %v1179 = vunpack.c.l.b16 %v1108
    %v1180 = vunpack.c.l.b16 %v1109
    %v1181 = vunpack.c.l.b16 %v1110
    %v1182 = vunpack.c.l.b16 %v1111
    %v1183 = vunpack.c.l.b16 %v1112
    %v1184 = vunpack.c.l.b16 %v1113
    %v1185 = vunpack.c.l.b16 %v1114
    %v1186 = vunpack.c.l.b16 %v1115
    %v1187 = vunpack.c.l.b16 %v1116
    %v1188 = vunpack.c.l.b16 %v1117
    %v1189 = vunpack.c.l.b16 %v1118
    %v1190 = vunpack.c.l.b16 %v1119
    %v1191 = vunpack.c.l.b16 %v1120
    %v1192 = vunpack.c.l.b16 %v1121
    %v1193 = vunpack.c.l.b16 %v1122
    %v1194 = vunpack.c.l.b16 %v1123
    %v1195 = vunpack.c.l.b16 %v1124
    %v1196 = vunpack.c.l.b16 %v1125
    %v1197 = vunpack.c.l.b16 %v1126
    %v1198 = vunpack.c.l.b16 %v1127
    %v1199 = vunpack.c.l.b16 %v1128
    %v1200 = vunpack.c.l.b16 %v1129
    %v1201 = vunpack.c.l.b16 %v1130
    %v1202 = vunpack.c.l.b16 %v1131
    %v1203 = vunpack.c.l.b16 %v1132
    %v1204 = vunpack.c.l.b16 %v1133
    %v1205 = vunpack.c.l.b16 %v1134
    %v1206 = vunpack.c.l.b16 %v1135
    %v1207 = vunpack.c.l.b16 %v1136
    %v1208 = vpack.c.b16 %v1177, %v1176
    %v1209 = vpack.c.b16 %v1179, %v1178
    %v1210 = vpack.c.b16 %v1181, %v1180
    %v1211 = vpack.c.b16 %v1183, %v1182
    %v1212 = vpack.c.b16 %v1185, %v1184
    %v1213 = vpack.c.b16 %v1187, %v1186
    %v1214 = vpack.c.b16 %v1189, %v1188
    %v1215 = vpack.c.b16 %v1191, %v1190
    %v1216 = vpack.c.b16 %v1193, %v1192
    %v1217 = vpack.c.b16 %v1195, %v1194
    %v1218 = vpack.c.b16 %v1197, %v1196
    %v1219 = vpack.c.b16 %v1199, %v1198
    %v1220 = vpack.c.b16 %v1201, %v1200
    %v1221 = vpack.c.b16 %v1203, %v1202
    %v1222 = vpack.c.b16 %v1205, %v1204
    %v1223 = vpack.c.b16 %v1207, %v1206
    %1240 = vmatprep.subr.bf16.mxu0 0
    %1241 = vmatpush1.bf16.msra.mxu0 %v1208
    %1242 = vmatprep.subr.bf16.mxu0 0
    %1243 = vmatpush1.bf16.msra.mxu0 %v1209
    %1244 = vmatprep.subr.bf16.mxu0 0
    %1245 = vmatpush1.bf16.msra.mxu0 %v1210
    %1246 = vmatprep.subr.bf16.mxu0 0
    %1247 = vmatpush1.bf16.msra.mxu0 %v1211
    %1248 = vmatprep.subr.bf16.mxu0 0
    %1249 = vmatpush1.bf16.msra.mxu0 %v1212
    %1250 = vmatprep.subr.bf16.mxu0 0
    %1251 = vmatpush1.bf16.msra.mxu0 %v1213
    %1252 = vmatprep.subr.bf16.mxu0 0
    %1253 = vmatpush1.bf16.msra.mxu0 %v1214
    %1254 = vmatprep.subr.bf16.mxu0 0
    %1255 = vmatpush1.bf16.msra.mxu0 %v1215
    %1256 = vmatprep.subr.bf16.mxu0 0
    %1257 = vmatpush1.bf16.msra.mxu0 %v1216
    %1258 = vmatprep.subr.bf16.mxu0 0
    %1259 = vmatpush1.bf16.msra.mxu0 %v1217
    %1260 = vmatprep.subr.bf16.mxu0 0
    %1261 = vmatpush1.bf16.msra.mxu0 %v1218
    %1262 = vmatprep.subr.bf16.mxu0 0
    %1263 = vmatpush1.bf16.msra.mxu0 %v1219
    %1264 = vmatprep.subr.bf16.mxu0 0
    %1265 = vmatpush1.bf16.msra.mxu0 %v1220
    %1266 = vmatprep.subr.bf16.mxu0 0
    %1267 = vmatpush1.bf16.msra.mxu0 %v1221
    %1268 = vmatprep.subr.bf16.mxu0 0
    %1269 = vmatpush1.bf16.msra.mxu0 %v1222
    %1270 = vmatprep.subr.bf16.mxu0 0
    %1271 = vmatpush1.bf16.msra.mxu0 %v1223
    %1272 = vmatprep.mubr.bf16.mxu0 %v1104
    %1273 = vmatmul.mubr.bf16.gmra.mrb[0].mxu0 %v1103
    %v1274 = vpop.f32.mrb[0].mxu0
    %v1275 = vadd.f32 %v1142, %v1274
    %v1276 = vpop.f32.mrb[0].mxu0
    %v1277 = vpop.f32.mrb[0].mxu0
    %v1278 = vadd.f32 %v1142, %v1277
    %v1279 = vpop.f32.mrb[0].mxu0
    %1280 = vdwg.mxu0
    %1281 = vst [vmem:[#allocation10] sm:$0xff] %v1275
    %1282 = vst [vmem:[#allocation10 + $0x8] sm:$0xff] %v1278
    // Predicated region
    $region46: #{tpu_custom_call.1} parent=1 // pred_check
      _
    $region47: #{tpu_custom_call.1} parent=1 // pred_check_branch
      %1284 = sbr.rel (0) target = $region49
    $region48: #{tpu_custom_call.1} parent=1 // pred_region
      %s1286 = ssub.s32 256, 256
      %1287 = vsyncadd [#allocation4], %s1286
      %s1288 = sshll.u32 [#allocation10], 4
      %s1289 = int_to_ptr.vmem [resolvable:$true] %s1288
      %1294 = dma.vmem_to_hbm [thread:$0]  %s1289, 256, %s7, [#allocation4], 128, 128, 8
    $region49: #{tpu_custom_call.1} parent=1 // pred_fallthru
      _
    // Predicated region
    $region50: #{tpu_custom_call.1} parent=1 // pred_check
      _
    $region51: #{tpu_custom_call.1} parent=1 // pred_check_branch
      %1296 = sbr.rel (0) target = $region53
    $region52: #{tpu_custom_call.1} parent=1 // pred_region
      %1297 = dma.done [#allocation4], 256
    $region53: #{tpu_custom_call.1} parent=1 // pred_fallthru
      _
    %1298 = vsyncpa [#allocation3], 1
    %1299 = vsyncpa [#allocation6], 1
    %1300 = vsyncpa [#allocation9], 1
    %1301 = vsyncpa [#allocation4], 1

</llo_original>
